<compile_context>
chip_gen: v5e
topology: v5e:2x2
jax: 0.10.0
libtpu: 0.0.40
codegen_flags: <defaults>
</compile_context>

<pallas_src>
import functools

import jax
import jax.numpy as jnp
from jax import lax
from jax.experimental import pallas as pl
from jax.experimental.pallas import tpu as pltpu

LANES = 128        # lane width of a vreg
NUM_CORES = 2      # leading "parallel" grid axis (v7x: 2 TCs; 1-TC chips just loop)


def _round_up(x, m):
    return (x + m - 1) // m * m


# ----------------------------------------------------------------------------
# Kernel: per-core partial sum of squared differences (streaming reduction)
# ----------------------------------------------------------------------------
def _rmse_partial_kernel(yhat_ref, y_ref, out_ref, acc_ref, *,
                         rows, cols, tr, tc, row_tiles_per_core):
    c = pl.program_id(0)   # core      ("parallel")
    i = pl.program_id(1)   # row tile  ("arbitrary" reduction)
    j = pl.program_id(2)   # col tile  ("arbitrary" reduction)

    @pl.when(jnp.logical_and(i == 0, j == 0))
    def _init():
        acc_ref[...] = jnp.zeros_like(acc_ref)

    # Logical (unclamped) tile origin.  The input index_map clamps the row
    # tile index so no DMA ever starts wholly past the array; correctness for
    # overhanging / duplicated tiles comes from masking with the *unclamped*
    # offsets below.
    row0 = (c * row_tiles_per_core + i) * tr
    col0 = j * tc

    # Compute in f32 regardless of input dtype.
    d = yhat_ref[...].astype(jnp.float32) - y_ref[...].astype(jnp.float32)

    partial_tile = jnp.logical_or(row0 + tr > rows, col0 + tc > cols)

    @pl.when(partial_tile)
    def _masked():   # edge tiles only: zero out-of-range elements
        rid = row0 + lax.broadcasted_iota(jnp.int32, (tr, tc), 0)
        cid = col0 + lax.broadcasted_iota(jnp.int32, (tr, tc), 1)
        dm = jnp.where(jnp.logical_and(rid < rows, cid < cols), d, 0.0)
        acc_ref[...] += jnp.sum(dm * dm, axis=0, keepdims=True)

    @pl.when(jnp.logical_not(partial_tile))
    def _fast():     # interior tiles: no mask work
        acc_ref[...] += jnp.sum(d * d, axis=0, keepdims=True)

    @pl.when(jnp.logical_and(i == pl.num_programs(1) - 1,
                             j == pl.num_programs(2) - 1))
    def _finalize():
        # One scalar partial per core, splatted into this core's output block.
        out_ref[...] = jnp.broadcast_to(jnp.sum(acc_ref[...]), out_ref.shape)


# ----------------------------------------------------------------------------
# Wrapper
# ----------------------------------------------------------------------------
def rmse_loss(yhat, y, eps=1e-6, target_block_bytes=2 << 20, max_tc=2048):
    """sqrt(MSE(yhat, y) + eps), matching torch RMSELoss (mean reduction)."""
    assert yhat.shape == y.shape, (yhat.shape, y.shape)
    n = 1
    for s in yhat.shape:
        n *= int(s)
    assert n > 0

    # 2-D view with NO padding (and no copy for <=2-D inputs): collapse the
    # leading dims; 0-D/1-D inputs become a single lane-major row.
    if yhat.ndim >= 2:
        to2d = lambda a: a.reshape(-1, a.shape[-1])
    else:
        to2d = lambda a: a.reshape(1, -1)
    yhat2, y2 = to2d(yhat), to2d(y)
    R, C = (int(s) for s in yhat2.shape)

    itemsize = jnp.dtype(yhat2.dtype).itemsize
    sub = {1: 32, 2: 16, 4: 8}.get(itemsize, 8)   # packed sublane multiple

    # Column tile: whole row if it fits, else a 128-aligned slab.
    tc = C if C <= max_tc else max_tc
    lanes_resident = _round_up(tc, LANES)         # VMEM lanes actually held

    # Row tile: ~target_block_bytes of VMEM per input per pipeline buffer.
    tr = max(sub, (target_block_bytes // (lanes_resident * itemsize)) // sub * sub)
    tr = min(tr, _round_up(R, sub))

    row_tiles = pl.cdiv(R, tr)
    col_tiles = pl.cdiv(C, tc)
    rt_per_core = pl.cdiv(row_tiles, NUM_CORES)

    def in_map(c, i, j):
        # Clamp so a duplicated trailing iteration re-reads the last valid
        # tile instead of DMA-ing fully out of bounds; the kernel masks its
        # contribution to zero using the unclamped offset.
        return (jnp.minimum(c * rt_per_core + i, row_tiles - 1), j)

    kernel = functools.partial(
        _rmse_partial_kernel,
        rows=R, cols=C, tr=tr, tc=tc, row_tiles_per_core=rt_per_core)

    out = pl.pallas_call(
        kernel,
        out_shape=jax.ShapeDtypeStruct((NUM_CORES * 8, LANES), jnp.float32),
        grid=(NUM_CORES, rt_per_core, col_tiles),
        in_specs=[
            pl.BlockSpec((tr, tc), in_map),
            pl.BlockSpec((tr, tc), in_map),
        ],
        out_specs=pl.BlockSpec((8, LANES), lambda c, i, j: (c, 0)),
        scratch_shapes=[pltpu.VMEM((1, tc), jnp.float32)],
        compiler_params=pltpu.CompilerParams(
            dimension_semantics=("parallel", "arbitrary", "arbitrary"),
            vmem_limit_bytes=32 << 20,
        ),
    )(yhat2, y2)

    # Tiny epilogue in the wrapper: one partial per core -> sqrt(mean + eps).
    total = jnp.sum(out[::8, 0])
    return jnp.sqrt(total * (1.0 / n) + eps)


# ----------------------------------------------------------------------------
# Self-test
# ----------------------------------------------------------------------------
if __name__ == "__main__":
    key = jax.random.PRNGKey(0)
    ks = jax.random.split(key, 10)

    # Case 1: petfinder-style predictions/targets, shape [B, 1] (tiny).
    a1 = jax.random.normal(ks[0], (8, 1), jnp.float32) * 20.0 + 50.0
    b1 = jax.random.uniform(ks[1], (8, 1), jnp.float32) * 100.0

    # Case 2: ragged 2-D, small target block -> multi row-tile grid with an
    # overhanging last tile and an odd tile split across the two "cores".
    a2 = jax.random.normal(ks[2], (300, 257), jnp.float32)
    b2 = jax.random.normal(ks[3], (300, 257), jnp.float32)

    # Case 3: wide rows -> column tiling with an overhanging last column tile.
    a3 = jax.random.normal(ks[4], (64, 3000), jnp.float32)
    b3 = jax.random.normal(ks[5], (64, 3000), jnp.float32)

    # Case 4: 1-D input.
    a4 = jax.random.normal(ks[6], (37,), jnp.float32)
    b4 = jax.random.normal(ks[7], (37,), jnp.float32)

    # Case 5: bf16 inputs (exercises the 16-sublane rounding path).
    a5 = jax.random.normal(ks[8], (130, 100), jnp.float32).astype(jnp.bfloat16)
    b5 = jax.random.normal(ks[9], (130, 100), jnp.float32).astype(jnp.bfloat16)

    cases = [
        (a1, b1, {}),
        (a2, b2, {"target_block_bytes": 128 * 1024}),
        (a3, b3, {}),
        (a4, b4, {}),
        (a5, b5, {}),
    ]
    for a, b, kw in cases:
        loss = jax.block_until_ready(rmse_loss(a, b, **kw))
        af, bf = a.astype(jnp.float32), b.astype(jnp.float32)
        ref = jnp.sqrt(jnp.mean((af - bf) ** 2) + 1e-6)
        assert loss.shape == (), loss.shape
        assert bool(jnp.isfinite(loss))
        rel = abs(float(loss) - float(ref)) / max(1.0, abs(float(ref)))
        assert rel < 1e-4, (a.shape, float(loss), float(ref))

    print("KERNEL_OK")
</pallas_src>

<mosaic_0001>
module attributes {stable_mosaic.version = 11 : i64} {
  func.func @_rmse_partial_kernel(%arg0: i32, %arg1: i32, %arg2: i32, %arg3: memref<8x1xf32, #tpu.memory_space<vmem>>, %arg4: memref<8x1xf32, #tpu.memory_space<vmem>>, %arg5: memref<8x128xf32, #tpu.memory_space<vmem>>, %arg6: memref<1x1xf32, #tpu.memory_space<vmem>>) attributes {dimension_semantics = [#tpu.dimension_semantics<parallel>, #tpu.dimension_semantics<arbitrary>, #tpu.dimension_semantics<arbitrary>], iteration_bounds = array<i64: 2, 1, 1>, scalar_prefetch = 0 : i64, scratch_operands = 1 : i64, tpu.core_type = #tpu.core_type<tc>, window_params = [{transform_indices = @transform_0, window_bounds = array<i64: 8, 1>}, {transform_indices = @transform_1, window_bounds = array<i64: 8, 1>}, {transform_indices = @transform_2, window_bounds = array<i64: 8, 128>}]} {
    %c0_i32 = arith.constant 0 : i32
    %0 = arith.cmpi eq, %arg1, %c0_i32 : i32
    %c0_i32_0 = arith.constant 0 : i32
    %1 = arith.cmpi eq, %arg2, %c0_i32_0 : i32
    %2 = arith.andi %0, %1 : i1
    %3 = arith.extui %2 : i1 to i32
    %c0_i32_1 = arith.constant 0 : i32
    %4 = arith.cmpi ne, %3, %c0_i32_1 : i32
    scf.if %4 {
      %cst = arith.constant 0.000000e+00 : f32
      %27 = vector.broadcast %cst : f32 to vector<1x1xf32>
      %c0_15 = arith.constant 0 : index
      %c0_16 = arith.constant 0 : index
      %28 = vector.load %arg6[%c0_15, %c0_16] : memref<1x1xf32, #tpu.memory_space<vmem>>, vector<1x1xf32>
      tpu.vector_store %arg6[%c0_15, %c0_16], %27 {strides = array<i32>} : memref<1x1xf32, #tpu.memory_space<vmem>>, vector<1x1xf32>,
    } else {
    }
    %c1_i32 = arith.constant 1 : i32
    %5 = arith.muli %arg0, %c1_i32 : i32
    %6 = arith.addi %5, %arg1 : i32
    %c8_i32 = arith.constant 8 : i32
    %7 = arith.muli %6, %c8_i32 : i32
    %c1_i32_2 = arith.constant 1 : i32
    %8 = arith.muli %arg2, %c1_i32_2 : i32
    %c0 = arith.constant 0 : index
    %c0_3 = arith.constant 0 : index
    %9 = vector.load %arg3[%c0, %c0_3] : memref<8x1xf32, #tpu.memory_space<vmem>>, vector<8x1xf32>
    %c0_4 = arith.constant 0 : index
    %c0_5 = arith.constant 0 : index
    %10 = vector.load %arg4[%c0_4, %c0_5] : memref<8x1xf32, #tpu.memory_space<vmem>>, vector<8x1xf32>
    %11 = arith.subf %9, %10 : vector<8x1xf32>
    %c8_i32_6 = arith.constant 8 : i32
    %12 = arith.addi %7, %c8_i32_6 : i32
    %c8_i32_7 = arith.constant 8 : i32
    %13 = arith.cmpi sgt, %12, %c8_i32_7 : i32
    %c1_i32_8 = arith.constant 1 : i32
    %14 = arith.addi %8, %c1_i32_8 : i32
    %c1_i32_9 = arith.constant 1 : i32
    %15 = arith.cmpi sgt, %14, %c1_i32_9 : i32
    %16 = arith.ori %13, %15 : i1
    %17 = arith.extui %16 : i1 to i32
    %c0_i32_10 = arith.constant 0 : i32
    %18 = arith.cmpi ne, %17, %c0_i32_10 : i32
    scf.if %18 {
      %27 = tpu.iota {dimensions = array<i32: 0>} : vector<8x1xi32>
      %28 = vector.broadcast %7 : i32 to vector<8x1xi32>
      %29 = arith.addi %28, %27 : vector<8x1xi32>
      %30 = tpu.iota {dimensions = array<i32: 1>} : vector<8x1xi32>
      %31 = vector.broadcast %8 : i32 to vector<8x1xi32>
      %32 = arith.addi %31, %30 : vector<8x1xi32>
      %c8_i32_15 = arith.constant 8 : i32
      %33 = vector.broadcast %c8_i32_15 : i32 to vector<8x1xi32>
      %34 = arith.cmpi slt, %29, %33 : vector<8x1xi32>
      %c1_i32_16 = arith.constant 1 : i32
      %35 = vector.broadcast %c1_i32_16 : i32 to vector<8x1xi32>
      %36 = arith.cmpi slt, %32, %35 : vector<8x1xi32>
      %37 = arith.andi %34, %36 : vector<8x1xi1>
      %cst = arith.constant 0.000000e+00 : f32
      %38 = vector.broadcast %cst : f32 to vector<8x1xf32>
      %39 = arith.select %37, %11, %38 : vector<8x1xi1>, vector<8x1xf32>
      %c0_17 = arith.constant 0 : index
      %c0_18 = arith.constant 0 : index
      %40 = vector.load %arg6[%c0_17, %c0_18] : memref<1x1xf32, #tpu.memory_space<vmem>>, vector<1x1xf32>
      %41 = arith.mulf %39, %39 : vector<8x1xf32>
      %cst_19 = arith.constant dense<0.000000e+00> : vector<1xf32>
      %42 = vector.multi_reduction <add>, %41, %cst_19 [0] : vector<8x1xf32> to vector<1xf32>
      %43 = vector.shape_cast %42 : vector<1xf32> to vector<1x1xf32>
      %44 = arith.addf %40, %43 : vector<1x1xf32>
      %c0_20 = arith.constant 0 : index
      %c0_21 = arith.constant 0 : index
      %45 = vector.load %arg6[%c0_20, %c0_21] : memref<1x1xf32, #tpu.memory_space<vmem>>, vector<1x1xf32>
      tpu.vector_store %arg6[%c0_20, %c0_21], %44 {strides = array<i32>} : memref<1x1xf32, #tpu.memory_space<vmem>>, vector<1x1xf32>,
    } else {
    }
    %true = arith.constant true
    %19 = arith.xori %16, %true : i1
    %20 = arith.extui %19 : i1 to i32
    %c0_i32_11 = arith.constant 0 : i32
    %21 = arith.cmpi ne, %20, %c0_i32_11 : i32
    scf.if %21 {
      %c0_15 = arith.constant 0 : index
      %c0_16 = arith.constant 0 : index
      %27 = vector.load %arg6[%c0_15, %c0_16] : memref<1x1xf32, #tpu.memory_space<vmem>>, vector<1x1xf32>
      %28 = arith.mulf %11, %11 : vector<8x1xf32>
      %cst = arith.constant dense<0.000000e+00> : vector<1xf32>
      %29 = vector.multi_reduction <add>, %28, %cst [0] : vector<8x1xf32> to vector<1xf32>
      %30 = vector.shape_cast %29 : vector<1xf32> to vector<1x1xf32>
      %31 = arith.addf %27, %30 : vector<1x1xf32>
      %c0_17 = arith.constant 0 : index
      %c0_18 = arith.constant 0 : index
      %32 = vector.load %arg6[%c0_17, %c0_18] : memref<1x1xf32, #tpu.memory_space<vmem>>, vector<1x1xf32>
      tpu.vector_store %arg6[%c0_17, %c0_18], %31 {strides = array<i32>} : memref<1x1xf32, #tpu.memory_space<vmem>>, vector<1x1xf32>,
    } else {
    }
    %c0_i32_12 = arith.constant 0 : i32
    %22 = arith.cmpi eq, %arg1, %c0_i32_12 : i32
    %c0_i32_13 = arith.constant 0 : i32
    %23 = arith.cmpi eq, %arg2, %c0_i32_13 : i32
    %24 = arith.andi %22, %23 : i1
    %25 = arith.extui %24 : i1 to i32
    %c0_i32_14 = arith.constant 0 : i32
    %26 = arith.cmpi ne, %25, %c0_i32_14 : i32
    scf.if %26 {
      %c0_15 = arith.constant 0 : index
      %c0_16 = arith.constant 0 : index
      %27 = vector.load %arg6[%c0_15, %c0_16] : memref<1x1xf32, #tpu.memory_space<vmem>>, vector<1x1xf32>
      %28 = vector.shape_cast %27 : vector<1x1xf32> to vector<1x1x1xf32>
      %cst = arith.constant dense<0.000000e+00> : vector<1xf32>
      %29 = vector.multi_reduction <add>, %28, %cst [1, 2] : vector<1x1x1xf32> to vector<1xf32>
      %30 = vector.shape_cast %29 : vector<1xf32> to vector<1x1x1xf32>
      %31 = vector.extract %30[0, 0, 0] : f32 from vector<1x1x1xf32>
      %32 = vector.broadcast %31 : f32 to vector<8x128xf32>
      %c0_17 = arith.constant 0 : index
      %c0_18 = arith.constant 0 : index
      %33 = vector.load %arg5[%c0_17, %c0_18] : memref<8x128xf32, #tpu.memory_space<vmem>>, vector<8x128xf32>
      tpu.vector_store %arg5[%c0_17, %c0_18], %32 {strides = array<i32>} : memref<8x128xf32, #tpu.memory_space<vmem>>, vector<8x128xf32>,
    } else {
    }
    return
  }
  func.func @transform_0(%arg0: i32, %arg1: i32, %arg2: i32) -> (i32, i32) {
    %c1_i32 = arith.constant 1 : i32
    %0 = arith.muli %arg0, %c1_i32 : i32
    %1 = arith.addi %0, %arg1 : i32
    %c0_i32 = arith.constant 0 : i32
    %2 = arith.minsi %1, %c0_i32 : i32
    %c0_i32_0 = arith.constant 0 : i32
    return %2, %arg2 : i32, i32
  }
  func.func @transform_1(%arg0: i32, %arg1: i32, %arg2: i32) -> (i32, i32) {
    %c1_i32 = arith.constant 1 : i32
    %0 = arith.muli %arg0, %c1_i32 : i32
    %1 = arith.addi %0, %arg1 : i32
    %c0_i32 = arith.constant 0 : i32
    %2 = arith.minsi %1, %c0_i32 : i32
    %c0_i32_0 = arith.constant 0 : i32
    return %2, %arg2 : i32, i32
  }
  func.func @transform_2(%arg0: i32, %arg1: i32, %arg2: i32) -> (i32, i32) {
    %c0_i32 = arith.constant 0 : i32
    %c0_i32_0 = arith.constant 0 : i32
    return %arg0, %c0_i32 : i32, i32
  }
}

</mosaic_0001>

<llo_original>
// kernel: tpu_custom_call.1
$region0: #{tpu_custom_call.1}
  #allocation0 [shape = 'u32[]', space=smem, size = 0x4, offset = 0x4, fixed_abs, tag = 'smem constant byte address 0x4 - core index']
  #allocation1 [shape = 'u32[72,128]{1,0:T(1,128)}', space=vmem, size = 0x9000, scoped, tag = 'internal scratch']
  #allocation2 [shape = 'f32[1,1]{1,0:T(1,128)}', space=vmem, size = 0x200, scoped, tag = 'scratch operand']
  %s0 = inlined_call_operand.vmem [shape: f32[8,1], index: 0, kind: input, shape index: {}]
  %s1 = inlined_call_operand.vmem [shape: f32[8,1], index: 1, kind: input, shape index: {}]
  %s2 = inlined_call_operand.hbm [shape: f32[16,128], index: 2, kind: output, shape index: {}]
  %s3 = sld [smem:[#allocation0]]
  $region57: #{tpu_custom_call.1} parent=0
    _
  %s5 = ssub.s32 1, %s3
  %s6 = scalar_select 0, %s5, %s3
  $region1: #{tpu_custom_call.1} parent=0
    #allocation3 [shape = 'u8[8192]{0}', space=vmem, size = 0x2000, scoped, tag = 'output window, operand 0']
    #allocation4 [shape = 's32[2]{0}', space=sflag, size = 0x8, scoped, tag = 'scoped memory for tpu_custom_call.1']
    %7 = vsyncpa [#allocation4], 0
    %s8 = scalar_lea.sflag [#allocation4], 1
    %9 = vsyncpa %s8, 0
    loop: start=0, step=1, limit=4
    $region2: #{tpu_custom_call.1} parent=1 // loop_pre_header
      _
    $region3: #{tpu_custom_call.1} parent=1 // loop_header
      %s11 = sphi 0, %s15
      %p12 = scmp.ge.s32.totalorder %s11, 4
      %s18 = sphi 0, %s37
      %s19 = sphi 0, %s33
      %s20 = sphi 0, %s29
      %s21 = sphi 0, %s18
      %s22 = sphi 0, %s19
      %s23 = sphi 0, %s20
      %s24 = sphi 0, %s21
      %s25 = sphi 0, %s22
      %s26 = sphi 0, %s23
      %s48 = sphi 0, %s50
      %s51 = sphi 0, %s48
      %s52 = sphi 0, %s51
      %s68 = sphi 0, %s52
      %s82 = sphi 0, %s84
      %s85 = sphi 0, %s82
      %s86 = sphi 0, %s85
      %s102 = sphi 0, %s86
      %s108 = sphi 0, %s110
      %s111 = sphi 0, %s108
      %s112 = sphi 0, %s111
      %s128 = sphi 0, %s112
    $region4: #{tpu_custom_call.1} parent=1 // loop_header_branch
      %14 = sbr.rel (%p12) target = $region8
    $region5: #{tpu_custom_call.1} parent=1 // loop_body
      %s16 = ssub.s32 %s11, 1
      %s17 = ssub.s32 %s11, 2
      %s27 = sadd.s32 1, %s20
      %p28 = scmp.ge.s32.totalorder %s27, 1
      %s29 = scalar_select %p28, 0, %s27
      %s30 = sadd.s32 1, %s19
      %s31 = scalar_select %p28, %s30, %s19
      %p32 = scmp.ge.s32.totalorder %s31, 1
      %s33 = scalar_select %p32, 0, %s31
      %s34 = sadd.s32 1, %s18
      %s35 = scalar_select %p32, %s34, %s18
      %p36 = scmp.ge.s32.totalorder %s35, 2
      %s37 = scalar_select %p36, 0, %s35
      %s38 = sadd.s32 %s18, %s19
      %p39 = scmp.lt.s32.totalorder %s38, 0
      %s40 = scalar_select %p39, %s38, 0
      %s41 = sadd.s32 %s37, %s33
      %p42 = scmp.lt.s32.totalorder %s41, 0
      %s43 = scalar_select %p42, %s41, 0
      %s44 = ssub.s32 %s40, %s43
      %s45 = ssub.s32 %s20, %s29
      %s46 = sor.u32 %s44, %s45
      %p47 = scmp.eq.s32.totalorder %s46, 0
      %s49 = sadd.s32 %s48, 1
      %s50 = scalar_select %p47, %s48, %s49
      %p53 = pneg %p47
      %p54 = scmp.eq.s32.totalorder %s11, 1
      %p55 = por %p53, %p54
      %p56 = scmp.ne.s32.totalorder %s48, %s51
      %p57 = scmp.eq.s32.totalorder %s11, 0
      %p58 = por %p56, %p57
      %p59 = scmp.ne.s32.totalorder %s48, %s51
      %p60 = scmp.eq.s32.totalorder %s16, 1
      %p61 = por %p59, %p60
      %p62 = scmp.ne.s32.totalorder %s51, %s52
      %p63 = scmp.eq.s32.totalorder %s16, 0
      %p64 = por %p62, %p63
      %p65 = scmp.ne.s32.totalorder %s51, %s52
      %p66 = scmp.eq.s32.totalorder %s17, 1
      %p67 = por %p65, %p66
      %p69 = scmp.ne.s32.totalorder %s52, %s68
      %p70 = scmp.eq.s32.totalorder %s17, 0
      %p71 = por %p69, %p70
      %s72 = sadd.s32 %s18, %s19
      %p73 = scmp.lt.s32.totalorder %s72, 0
      %s74 = scalar_select %p73, %s72, 0
      %s75 = sadd.s32 %s37, %s33
      %p76 = scmp.lt.s32.totalorder %s75, 0
      %s77 = scalar_select %p76, %s75, 0
      %s78 = ssub.s32 %s74, %s77
      %s79 = ssub.s32 %s20, %s29
      %s80 = sor.u32 %s78, %s79
      %p81 = scmp.eq.s32.totalorder %s80, 0
      %s83 = sadd.s32 %s82, 1
      %s84 = scalar_select %p81, %s82, %s83
      %p87 = pneg %p81
      %p88 = scmp.eq.s32.totalorder %s11, 1
      %p89 = por %p87, %p88
      %p90 = scmp.ne.s32.totalorder %s82, %s85
      %p91 = scmp.eq.s32.totalorder %s11, 0
      %p92 = por %p90, %p91
      %p93 = scmp.ne.s32.totalorder %s82, %s85
      %p94 = scmp.eq.s32.totalorder %s16, 1
      %p95 = por %p93, %p94
      %p96 = scmp.ne.s32.totalorder %s85, %s86
      %p97 = scmp.eq.s32.totalorder %s16, 0
      %p98 = por %p96, %p97
      %p99 = scmp.ne.s32.totalorder %s85, %s86
      %p100 = scmp.eq.s32.totalorder %s17, 1
      %p101 = por %p99, %p100
      %p103 = scmp.ne.s32.totalorder %s86, %s102
      %p104 = scmp.eq.s32.totalorder %s17, 0
      %p105 = por %p103, %p104
      %s106 = ssub.s32 %s18, %s37
      %p107 = scmp.eq.s32.totalorder %s106, 0
      %s109 = sadd.s32 %s108, 1
      %s110 = scalar_select %p107, %s108, %s109
      %p113 = pneg %p107
      %p114 = scmp.eq.s32.totalorder %s11, 1
      %p115 = por %p113, %p114
      %p116 = scmp.ne.s32.totalorder %s108, %s111
      %p117 = scmp.eq.s32.totalorder %s11, 0
      %p118 = por %p116, %p117
      %p119 = scmp.ne.s32.totalorder %s108, %s111
      %p120 = scmp.eq.s32.totalorder %s16, 1
      %p121 = por %p119, %p120
      %p122 = scmp.ne.s32.totalorder %s111, %s112
      %p123 = scmp.eq.s32.totalorder %s16, 0
      %p124 = por %p122, %p123
      %p125 = scmp.ne.s32.totalorder %s111, %s112
      %p126 = scmp.eq.s32.totalorder %s17, 1
      %p127 = por %p125, %p126
      %p129 = scmp.ne.s32.totalorder %s112, %s128
      %p130 = scmp.eq.s32.totalorder %s17, 0
      %p131 = por %p129, %p130
      %p132 = scmp.le.s32.totalorder 1, %s11
      %p133 = scmp.lt.s32.totalorder %s11, 3
      %p134 = pnand %p132, %p133
      %p135 = pneg %p134
      // Predicated region
      $region9: #{tpu_custom_call.1} parent=5 // pred_check
        _
      $region10: #{tpu_custom_call.1} parent=5 // pred_check_branch
        %137 = sbr.rel (%p134) target = $region12
      $region11: #{tpu_custom_call.1} parent=5 // pred_region
        %s138 = ssub.s32 %s11, 1
      $region12: #{tpu_custom_call.1} parent=5 // pred_fallthru
        _
      %p139 = scmp.lt.s32.totalorder %s11, 2
      // Predicated region
      $region13: #{tpu_custom_call.1} parent=5 // pred_check
        %p140 = pneg %p139
      $region14: #{tpu_custom_call.1} parent=5 // pred_check_branch
        %142 = sbr.rel (%p140) target = $region16
      $region15: #{tpu_custom_call.1} parent=5 // pred_region
        // Predicated region
        $region17: #{tpu_custom_call.1} parent=15 // pred_check
          %p143 = pneg %p58
        $region18: #{tpu_custom_call.1} parent=15 // pred_check_branch
          %145 = sbr.rel (%p143) target = $region20
        $region19: #{tpu_custom_call.1} parent=15 // pred_region
          %s146 = sadd.s32 %s18, %s19
          %p147 = scmp.lt.s32.totalorder %s146, 0
          %s148 = scalar_select %p147, %s146, 0
          %p149 = scmp.lt.s32.totalorder %s148, 0
          %s150 = scalar_select %p149, %s148, 0
          %p151 = scmp.lt.s32.totalorder %s20, 0
          %s152 = scalar_select %p151, %s20, 0
          %s153 = sadd.s32 %s152, %s150
          %s154 = smul.addr %s153, 8
          %s155 = scalar_lea.vmem %s0, %s154
          %s156 = sadd.s32 %s18, %s19
          %p157 = scmp.lt.s32.totalorder %s156, 0
          %s158 = scalar_select %p157, %s156, 0
        $region20: #{tpu_custom_call.1} parent=15 // pred_fallthru
          _
        // Predicated region
        $region21: #{tpu_custom_call.1} parent=15 // pred_check
          %p159 = pneg %p92
        $region22: #{tpu_custom_call.1} parent=15 // pred_check_branch
          %161 = sbr.rel (%p159) target = $region24
        $region23: #{tpu_custom_call.1} parent=15 // pred_region
          %s162 = sadd.s32 %s18, %s19
          %p163 = scmp.lt.s32.totalorder %s162, 0
          %s164 = scalar_select %p163, %s162, 0
          %p165 = scmp.lt.s32.totalorder %s164, 0
          %s166 = scalar_select %p165, %s164, 0
          %p167 = scmp.lt.s32.totalorder %s20, 0
          %s168 = scalar_select %p167, %s20, 0
          %s169 = sadd.s32 %s168, %s166
          %s170 = smul.addr %s169, 8
          %s171 = scalar_lea.vmem %s1, %s170
          %s172 = sadd.s32 %s18, %s19
          %p173 = scmp.lt.s32.totalorder %s172, 0
          %s174 = scalar_select %p173, %s172, 0
        $region24: #{tpu_custom_call.1} parent=15 // pred_fallthru
          _
      $region16: #{tpu_custom_call.1} parent=5 // pred_fallthru
        _
      %p175 = scmp.le.s32.totalorder 1, %s11
      %p176 = scmp.lt.s32.totalorder %s11, 3
      %p177 = pnand %p175, %p176
      %p178 = pneg %p177
      // Predicated region
      $region25: #{tpu_custom_call.1} parent=5 // pred_check
        _
      $region26: #{tpu_custom_call.1} parent=5 // pred_check_branch
        %180 = sbr.rel (%p177) target = $region28
      $region27: #{tpu_custom_call.1} parent=5 // pred_region
        %s181 = ssub.s32 %s11, 1
        %s182 = sadd.s32 %s21, %s22
        %p183 = scmp.lt.s32.totalorder %s182, 0
        %s184 = scalar_select %p183, %s182, 0
        %p185 = scmp.lt.s32.totalorder %s184, 0
        %s186 = scalar_select %p185, %s184, 0
        %p187 = scmp.lt.s32.totalorder %s23, 0
        %s188 = scalar_select %p187, %s23, 0
        %s189 = sadd.s32 %s188, %s186
        %s190 = smul.addr %s189, 8
        %s191 = scalar_lea.vmem %s0, %s190
        %p192 = pneg %p64
        %p193 = pneg %p61
        %s194 = sadd.s32 %s21, %s22
        %p195 = scmp.lt.s32.totalorder %s194, 0
        %s196 = scalar_select %p195, %s194, 0
        %p197 = scmp.lt.s32.totalorder %s196, 0
        %s198 = scalar_select %p197, %s196, 0
        %p199 = scmp.lt.s32.totalorder %s23, 0
        %s200 = scalar_select %p199, %s23, 0
        %s201 = sadd.s32 %s200, %s198
        %s202 = smul.addr %s201, 8
        %s203 = scalar_lea.vmem %s1, %s202
        %p204 = pneg %p98
        %p205 = pneg %p95
        %p206 = pneg %p124
        %p207 = pneg %p121
        %s208 = sand.u32 %s111, 1
        %s209 = scalar_lea.sflag [#allocation4], %s208
        %s210 = sand.u32 %s111, 1
        %s211 = smul.addr %s210, 8
        %s212 = scalar_lea.vmem [#allocation3], %s211
        %s213 = sadd.s32 %s21, %s22
        %p214 = scmp.lt.s32.totalorder %s213, 0
        %s215 = scalar_select %p214, %s213, 0
        %p216 = scmp.lt.s32.totalorder %s215, 0
        %s217 = scalar_select %p216, %s215, 0
        %p218 = scmp.lt.s32.totalorder %s23, 0
        %s219 = scalar_select %p218, %s23, 0
        %s220 = sadd.s32 %s219, %s217
        %s221 = smul.addr %s220, 8
        %s222 = scalar_lea.vmem %s0, %s221
        %s223 = sadd.s32 %s21, %s22
        %p224 = scmp.lt.s32.totalorder %s223, 0
        %s225 = scalar_select %p224, %s223, 0
        %s226 = sadd.s32 %s21, %s22
        %p227 = scmp.lt.s32.totalorder %s226, 0
        %s228 = scalar_select %p227, %s226, 0
        %p229 = scmp.lt.s32.totalorder %s228, 0
        %s230 = scalar_select %p229, %s228, 0
        %p231 = scmp.lt.s32.totalorder %s23, 0
        %s232 = scalar_select %p231, %s23, 0
        %s233 = sadd.s32 %s232, %s230
        %s234 = smul.addr %s233, 8
        %s235 = scalar_lea.vmem %s1, %s234
        %s236 = sadd.s32 %s21, %s22
        %p237 = scmp.lt.s32.totalorder %s236, 0
        %s238 = scalar_select %p237, %s236, 0
        %p239 = scmp.eq.s32.totalorder %s22, 0
        %p240 = scmp.eq.s32.totalorder %s23, 0
        %p241 = pnand %p239, %p240
        %p242 = pneg %p241
        // Predicated region
        $region29: #{tpu_custom_call.1} parent=27 // pred_check
          _
        $region30: #{tpu_custom_call.1} parent=27 // pred_check_branch
          %244 = sbr.rel (%p241) target = $region32
        $region31: #{tpu_custom_call.1} parent=27 // pred_region
          %vm245 = vcmask 0
          %246 = vst.msk [vmem:[#allocation2] sm:$0x1] %vm245, 0.0
        $region32: #{tpu_custom_call.1} parent=27 // pred_fallthru
          _
        %s247 = sadd.s32 %s21, %s22
        %s248 = smul.u32 %s247, 8
        %v249 = vld [vmem:[%s222] sm:$0xff]
        %v250 = vld [vmem:[%s235] sm:$0xff]
        %v251 = vsub.f32 %v249, %v250
        %s252 = sadd.s32 %s248, 8
        %p253 = scmp.gt.s32.totalorder %s252, 8
        %s254 = sadd.s32 %s23, 1
        %p255 = scmp.gt.s32.totalorder %s254, 1
        %p256 = por %p253, %p255
        // Predicated region
        $region33: #{tpu_custom_call.1} parent=27 // pred_check
          %p257 = pneg %p256
        $region34: #{tpu_custom_call.1} parent=27 // pred_check_branch
          %259 = sbr.rel (%p257) target = $region36
        $region35: #{tpu_custom_call.1} parent=27 // pred_region
          %v260 = vlaneseq
          %v261 = vshrl.u32 %v260, 7
          %v262 = vstv %s248
          %v263 = vadd.s32 %v262, %v261
          %v264 = vlaneseq
          %v265 = vand.u32 %v264, 127
          %v266 = vstv %s23
          %v267 = vadd.s32 %v266, %v265
          %vm268 = vcmp.lt.s32.totalorder %v263, 8
          %vm269 = vcmp.lt.s32.totalorder %v267, 1
          %vm270 = vmand %vm268, %vm269
          %v271 = vsel %vm270, %v251, 0.0
          %v272 = vld [vmem:[#allocation2] sm:$0x1]
          %v273 = vmul.f32 %v271, %v271
          %vm274 = vcmask 7168
          %v275 = vsel %vm274, %v273, 0.0
          %v276 = vrot.slane %v275, 4
          %v277 = vadd.f32 %v275, %v276
          %v278 = vrot.slane %v277, 2
          %v279 = vadd.f32 %v277, %v278
          %v280 = vrot.slane %v279, 1
          %v281 = vadd.f32 %v279, %v280
          %v282 = vadd.f32 %v272, %v281
          %vm283 = vcmask 0
          %284 = vst.msk [vmem:[#allocation2] sm:$0x1] %vm283, %v282
        $region36: #{tpu_custom_call.1} parent=27 // pred_fallthru
          _
        %p285 = pneg %p256
        // Predicated region
        $region37: #{tpu_custom_call.1} parent=27 // pred_check
          _
        $region38: #{tpu_custom_call.1} parent=27 // pred_check_branch
          %287 = sbr.rel (%p256) target = $region40
        $region39: #{tpu_custom_call.1} parent=27 // pred_region
          %v288 = vld [vmem:[#allocation2] sm:$0x1]
          %v289 = vmul.f32 %v251, %v251
          %vm290 = vcmask 7168
          %v291 = vsel %vm290, %v289, 0.0
          %v292 = vrot.slane %v291, 4
          %v293 = vadd.f32 %v291, %v292
          %v294 = vrot.slane %v293, 2
          %v295 = vadd.f32 %v293, %v294
          %v296 = vrot.slane %v295, 1
          %v297 = vadd.f32 %v295, %v296
          %v298 = vadd.f32 %v288, %v297
          %vm299 = vcmask 0
          %300 = vst.msk [vmem:[#allocation2] sm:$0x1] %vm299, %v298
        $region40: #{tpu_custom_call.1} parent=27 // pred_fallthru
          _
        // Predicated region
        $region41: #{tpu_custom_call.1} parent=27 // pred_check
          _
        $region42: #{tpu_custom_call.1} parent=27 // pred_check_branch
          %302 = sbr.rel (%p241) target = $region44
        $region43: #{tpu_custom_call.1} parent=27 // pred_region
          %v303 = vld [vmem:[#allocation2] sm:$0x1]
          %v304 = vadd.f32 %v303, 0.0
          %s305 = vtos %v304
          %v306 = vstv %s305
          %307 = vst [vmem:[%s212] sm:$0xff] %v306
        $region44: #{tpu_custom_call.1} parent=27 // pred_fallthru
          _
        %s308 = sand.u32 %s111, 1
        %s309 = scalar_lea.sflag [#allocation4], %s308
        %s310 = sand.u32 %s111, 1
        %s311 = smul.addr %s310, 8
        %s312 = scalar_lea.vmem [#allocation3], %s311
        // Predicated region
        $region45: #{tpu_custom_call.1} parent=27 // pred_check
          %p313 = pneg %p121
        $region46: #{tpu_custom_call.1} parent=27 // pred_check_branch
          %315 = sbr.rel (%p313) target = $region48
        $region47: #{tpu_custom_call.1} parent=27 // pred_region
          %317 = vsyncadd %s309, 0
          %s318 = smul.addr %s21, 8
          %s319 = scalar_lea.hbm %s2, %s318
          %s321 = sshll.u32 %s312, 4
          %s322 = int_to_ptr.vmem [resolvable:$true] %s321
          %s323 = sshll.u32 %s319, 4
          %s324 = int_to_ptr.hbm [resolvable:$true] %s323
          %326 = dma.vmem_to_hbm [thread:$0]  %s322, 128, %s324, %s309
        $region48: #{tpu_custom_call.1} parent=27 // pred_fallthru
          _
      $region28: #{tpu_custom_call.1} parent=5 // pred_fallthru
        _
      %p327 = scmp.le.s32.totalorder 2, %s11
      // Predicated region
      $region49: #{tpu_custom_call.1} parent=5 // pred_check
        %p328 = pneg %p327
      $region50: #{tpu_custom_call.1} parent=5 // pred_check_branch
        %330 = sbr.rel (%p328) target = $region52
      $region51: #{tpu_custom_call.1} parent=5 // pred_region
        %s331 = ssub.s32 %s11, 2
        // Predicated region
        $region53: #{tpu_custom_call.1} parent=51 // pred_check
          %p332 = pneg %p127
        $region54: #{tpu_custom_call.1} parent=51 // pred_check_branch
          %334 = sbr.rel (%p332) target = $region56
        $region55: #{tpu_custom_call.1} parent=51 // pred_region
          %s335 = sand.u32 %s112, 1
          %s336 = scalar_lea.sflag [#allocation4], %s335
          %s337 = sand.u32 %s112, 1
          %s338 = smul.addr %s337, 8
          %s339 = scalar_lea.vmem [#allocation3], %s338
          %341 = dma.done %s336, 128
        $region56: #{tpu_custom_call.1} parent=51 // pred_fallthru
          _
      $region52: #{tpu_custom_call.1} parent=5 // pred_fallthru
        _
    $region6: #{tpu_custom_call.1} parent=1 // loop_footer
      %s15 = sadd.s32 1, %s11
    $region7: #{tpu_custom_call.1} parent=1 // loop_footer_branch
      %10 = sbr.rel target = $region3
    $region8: #{tpu_custom_call.1} parent=1 // loop_exit
      _
    %342 = vsyncpa [#allocation4], 1
    %s343 = scalar_lea.sflag [#allocation4], 1
    %344 = vsyncpa %s343, 1

</llo_original>
